<compile_context>
chip_gen: v7x
topology: tpu7x:2x2x1
jax: 0.10.0
libtpu: 0.0.40
codegen_flags: <defaults>
</compile_context>

<pallas_src>
import jax
import jax.numpy as jnp
from jax.experimental import pallas as pl
from jax.experimental.pallas import tpu as pltpu


def outconv_kernel(x_ref, w_ref, b_ref, o_ref):
    """Fused Conv1d(kernel_size=3, padding=1) + Sigmoid, batch folded into rows.

    x_ref: (N*Cin, L)          batch-flattened input rows (contiguous reshape)
    w_ref: (3, N*Cout, N*Cin)  per-tap weights, block-diagonal over batch
    b_ref: (N*Cout, 1)         bias tiled over batch (broadcasts over L)
    o_ref: (N*Cout, L)         batch-flattened output rows
    """
    x = x_ref[...].astype(jnp.float32)                 # (R, L)
    L = x.shape[-1]

    # pad=1 halo via tiny shift matrices on the MXU:
    #   x_prev[:, l] = x[:, l-1] (0 at l=0),  x_next[:, l] = x[:, l+1] (0 at l=L-1).
    # No slices/concats/XLU rotates -> nothing to relayout; boundary zeros are free.
    row = jax.lax.broadcasted_iota(jnp.int32, (L, L), 0)
    col = jax.lax.broadcasted_iota(jnp.int32, (L, L), 1)
    s_prev = (row == col - 1).astype(jnp.float32)      # S[j, l] = 1  iff j == l-1
    s_next = (row == col + 1).astype(jnp.float32)      # S[j, l] = 1  iff j == l+1
    x_prev = jnp.dot(x, s_prev, preferred_element_type=jnp.float32)
    x_next = jnp.dot(x, s_next, preferred_element_type=jnp.float32)

    # Three accumulating per-tap matmuls (no im2col sublane stack), f32 accumulate.
    acc = jnp.dot(w_ref[0], x_prev, preferred_element_type=jnp.float32)
    acc = acc + jnp.dot(w_ref[1], x, preferred_element_type=jnp.float32)
    acc = acc + jnp.dot(w_ref[2], x_next, preferred_element_type=jnp.float32)
    acc = acc + b_ref[...]                             # one broadcast-add over L

    # Single store of the whole result; sigmoid epilogue stays in f32
    # (v5e has no bf16 VPU/EUP).
    o_ref[...] = jax.nn.sigmoid(acc).astype(o_ref.dtype)


@jax.jit
def outconv_pallas(x_ncl, weight, bias):
    """x_ncl: (N, Cin, L); weight: (Cout, Cin, 3) [PyTorch layout]; bias: (Cout,)."""
    N, Cin, L = x_ncl.shape
    Cout = weight.shape[0]

    # Free, contiguous reshape of x (metadata only — no transpose, no pad, no
    # extra HBM traffic): batch rows stack on the sublane axis.
    x2d = x_ncl.reshape(N * Cin, L)

    # Parameter prep only (a few dozen elements).  Per-tap weights, replicated
    # block-diagonally over the batch so one matmul per tap covers all N:
    #   w_bd[k, n*Cout + o, m*Cin + c] = (n == m) * weight[o, c, k]
    eye_n = jnp.eye(N, dtype=weight.dtype)
    w_bd = jnp.stack([jnp.kron(eye_n, weight[:, :, k]) for k in range(3)])
    b_bd = jnp.tile(bias, N).reshape(N * Cout, 1)

    out2d = pl.pallas_call(
        outconv_kernel,
        out_shape=jax.ShapeDtypeStruct((N * Cout, L), x_ncl.dtype),
        in_specs=[
            pl.BlockSpec(memory_space=pltpu.MemorySpace.VMEM),   # x  (N*Cin, L)
            pl.BlockSpec(memory_space=pltpu.MemorySpace.VMEM),   # w  (3, N*Cout, N*Cin)
            pl.BlockSpec(memory_space=pltpu.MemorySpace.VMEM),   # b  (N*Cout, 1)
        ],
        out_specs=pl.BlockSpec(memory_space=pltpu.MemorySpace.VMEM),
    )(x2d, w_bd, b_bd)

    # Free, contiguous reshape back to PyTorch NCL layout.
    return out2d.reshape(N, Cout, L)


def outconv_reference(x_ncl, weight, bias):
    """Pure-JAX reference of nn.Conv1d(k=3, pad=1) + sigmoid, NCL layout."""
    out = jax.lax.conv_general_dilated(
        x_ncl, weight,
        window_strides=(1,), padding=((1, 1),),
        dimension_numbers=("NCH", "OIH", "NCH"),
    )
    return jax.nn.sigmoid(out + bias[None, :, None])


if __name__ == "__main__":
    # Small shapes consistent with the module: batch=2, in_channels=4,
    # out_channels=3, length=16.
    N, Cin, Cout, L = 2, 4, 3, 16

    key = jax.random.PRNGKey(0)
    kx, kw, kb = jax.random.split(key, 3)
    x = jax.random.normal(kx, (N, Cin, L), dtype=jnp.float32)
    # Deterministic parameter init (kaiming-uniform-like range, synthetic).
    fan_in = Cin * 3
    bound = 1.0 / (fan_in ** 0.5)
    weight = jax.random.uniform(kw, (Cout, Cin, 3), jnp.float32, -bound, bound)
    bias = jax.random.uniform(kb, (Cout,), jnp.float32, -bound, bound)

    out = jax.block_until_ready(outconv_pallas(x, weight, bias))
    ref = jax.block_until_ready(outconv_reference(x, weight, bias))

    assert out.shape == (N, Cout, L)
    assert jnp.allclose(out, ref, atol=1e-5, rtol=1e-5)

    print("KERNEL_OK")
</pallas_src>

<mosaic_0001>
module attributes {stable_mosaic.version = 11 : i64} {
  func.func @outconv_kernel(%arg0: memref<8x16xf32, #tpu.memory_space<vmem>>, %arg1: memref<3x6x8xf32, #tpu.memory_space<vmem>>, %arg2: memref<6x1xf32, #tpu.memory_space<vmem>>, %arg3: memref<6x16xf32, #tpu.memory_space<vmem>>) attributes {dimension_semantics = [], scalar_prefetch = 0 : i64, scratch_operands = 0 : i64, tpu.core_type = #tpu.core_type<tc>} {
    %c0 = arith.constant 0 : index
    %c0_0 = arith.constant 0 : index
    %0 = vector.load %arg0[%c0, %c0_0] : memref<8x16xf32, #tpu.memory_space<vmem>>, vector<8x16xf32>
    %1 = tpu.iota {dimensions = array<i32: 0>} : vector<16x16xi32>
    %2 = tpu.iota {dimensions = array<i32: 1>} : vector<16x16xi32>
    %c1_i32 = arith.constant 1 : i32
    %3 = vector.broadcast %c1_i32 : i32 to vector<16x16xi32>
    %4 = arith.subi %2, %3 : vector<16x16xi32>
    %5 = arith.cmpi eq, %1, %4 : vector<16x16xi32>
    %6 = arith.extui %5 : vector<16x16xi1> to vector<16x16xi32>
    %7 = arith.sitofp %6 : vector<16x16xi32> to vector<16x16xf32>
    %c1_i32_1 = arith.constant 1 : i32
    %8 = vector.broadcast %c1_i32_1 : i32 to vector<16x16xi32>
    %9 = arith.addi %2, %8 : vector<16x16xi32>
    %10 = arith.cmpi eq, %1, %9 : vector<16x16xi32>
    %11 = arith.extui %10 : vector<16x16xi1> to vector<16x16xi32>
    %12 = arith.sitofp %11 : vector<16x16xi32> to vector<16x16xf32>
    %cst = arith.constant dense<0.000000e+00> : vector<8x16xf32>
    %13 = tpu.matmul %0, %7, %cst {dimension_numbers = #tpu.dot_dimension_numbers<[1], [0], [0], [1], [0, 0, 1, 1], [], []>} : vector<8x16xf32>, vector<16x16xf32>, vector<8x16xf32> -> vector<8x16xf32>
    %cst_2 = arith.constant dense<0.000000e+00> : vector<8x16xf32>
    %14 = tpu.matmul %0, %12, %cst_2 {dimension_numbers = #tpu.dot_dimension_numbers<[1], [0], [0], [1], [0, 0, 1, 1], [], []>} : vector<8x16xf32>, vector<16x16xf32>, vector<8x16xf32> -> vector<8x16xf32>
    %c0_3 = arith.constant 0 : index
    %c0_4 = arith.constant 0 : index
    %c0_5 = arith.constant 0 : index
    %15 = vector.load %arg1[%c0_3, %c0_4, %c0_5] : memref<3x6x8xf32, #tpu.memory_space<vmem>>, vector<1x6x8xf32>
    %16 = vector.shape_cast %15 : vector<1x6x8xf32> to vector<6x8xf32>
    %cst_6 = arith.constant dense<0.000000e+00> : vector<6x16xf32>
    %17 = tpu.matmul %16, %13, %cst_6 {dimension_numbers = #tpu.dot_dimension_numbers<[1], [0], [0], [1], [0, 0, 1, 1], [], []>} : vector<6x8xf32>, vector<8x16xf32>, vector<6x16xf32> -> vector<6x16xf32>
    %c1 = arith.constant 1 : index
    %c0_7 = arith.constant 0 : index
    %c0_8 = arith.constant 0 : index
    %18 = vector.load %arg1[%c1, %c0_7, %c0_8] : memref<3x6x8xf32, #tpu.memory_space<vmem>>, vector<1x6x8xf32>
    %19 = vector.shape_cast %18 : vector<1x6x8xf32> to vector<6x8xf32>
    %cst_9 = arith.constant dense<0.000000e+00> : vector<6x16xf32>
    %20 = tpu.matmul %19, %0, %cst_9 {dimension_numbers = #tpu.dot_dimension_numbers<[1], [0], [0], [1], [0, 0, 1, 1], [], []>} : vector<6x8xf32>, vector<8x16xf32>, vector<6x16xf32> -> vector<6x16xf32>
    %21 = arith.addf %17, %20 : vector<6x16xf32>
    %c2 = arith.constant 2 : index
    %c0_10 = arith.constant 0 : index
    %c0_11 = arith.constant 0 : index
    %22 = vector.load %arg1[%c2, %c0_10, %c0_11] : memref<3x6x8xf32, #tpu.memory_space<vmem>>, vector<1x6x8xf32>
    %23 = vector.shape_cast %22 : vector<1x6x8xf32> to vector<6x8xf32>
    %cst_12 = arith.constant dense<0.000000e+00> : vector<6x16xf32>
    %24 = tpu.matmul %23, %14, %cst_12 {dimension_numbers = #tpu.dot_dimension_numbers<[1], [0], [0], [1], [0, 0, 1, 1], [], []>} : vector<6x8xf32>, vector<8x16xf32>, vector<6x16xf32> -> vector<6x16xf32>
    %25 = arith.addf %21, %24 : vector<6x16xf32>
    %c0_13 = arith.constant 0 : index
    %c0_14 = arith.constant 0 : index
    %26 = vector.load %arg2[%c0_13, %c0_14] : memref<6x1xf32, #tpu.memory_space<vmem>>, vector<6x1xf32>
    %27 = vector.broadcast %26 : vector<6x1xf32> to vector<6x16xf32>
    %28 = arith.addf %25, %27 : vector<6x16xf32>
    %29 = arith.negf %28 : vector<6x16xf32>
    %30 = math.exp %29 : vector<6x16xf32>
    %cst_15 = arith.constant 1.000000e+00 : f32
    %31 = vector.broadcast %cst_15 : f32 to vector<6x16xf32>
    %32 = arith.addf %31, %30 : vector<6x16xf32>
    %33 = arith.divf %31, %32 : vector<6x16xf32>
    %c0_16 = arith.constant 0 : index
    %c0_17 = arith.constant 0 : index
    %34 = vector.load %arg3[%c0_16, %c0_17] : memref<6x16xf32, #tpu.memory_space<vmem>>, vector<6x16xf32>
    tpu.vector_store %arg3[%c0_16, %c0_17], %33 {strides = array<i32>} : memref<6x16xf32, #tpu.memory_space<vmem>>, vector<6x16xf32>,
    return
  }
}

</mosaic_0001>

<llo_original>
// kernel: tile.0
$region0: #{tile.0}
  %s0 = inlined_call_operand.vmem [shape: f32[2,3], index: 0, kind: input, shape index: {}]
  %s1 = inlined_call_operand.vmem [shape: f32[6,1], index: 1, kind: output, shape index: {}]
  $region1: #{tile.0} parent=0
    #allocation0 [shape = 'u8[4096]{0}', space=vmem, size = 0x1000, scoped, tag = 'scoped mem for input reshape']
    %s3 = sshllo.u32 0, 2
    %v4 = vld [vmem:[%s0] sm:%s3]
    %5 = vst [vmem:[#allocation0] sm:%s3] %v4
    %v6 = vld [vmem:[#allocation0] sm:$0x3]
    %vm7 = vcmask 7168
    %8 = vst.msk [vmem:[%s1] ss:$3 sm:$0x3] %vm7, %v6
    %v9 = vld [vmem:[#allocation0] sm:$0x3]
    %10 = vrot.lane.b32.xlu0 %v9, 127
    %v11 = vpop.permute.xlu0 %10
    %vm12 = vcmask 7168
    %s13 = scalar_lea.vmem %s1, 1
    %14 = vst.msk [vmem:[%s13] ss:$3 sm:$0x3] %vm12, %v11
    %v15 = vld [vmem:[#allocation0] sm:$0x3]
    %16 = vrot.lane.b32.xlu0 %v15, 126
    %v17 = vpop.permute.xlu0 %16
    %vm18 = vcmask 7168
    %s19 = scalar_lea.vmem %s1, 2
    %20 = vst.msk [vmem:[%s19] ss:$3 sm:$0x3] %vm18, %v17

// kernel: tile.8
$region0: #{tile.8}
  #allocation0 [shape = 's32[1]{0}', space=sflag, size = 0x4, scoped, tag = 'scoped memory for tile.8']
  %s0 = inlined_call_operand.vmem [shape: f32[3], index: 0, kind: input, shape index: {}]
  %s1 = inlined_call_operand.vmem [shape: f32[2,3], index: 1, kind: output, shape index: {}]
  // Predicated region
  $region2: #{tile.8} parent=0 // pred_check
    _
  $region3: #{tile.8} parent=0 // pred_check_branch
    %3 = sbr.rel (0) target = $region5
  $region4: #{tile.8} parent=0 // pred_region
    _
  $region5: #{tile.8} parent=0 // pred_fallthru
    _
  %v4 = vld [vmem:[%s0] ss:$0 sm:$0xff]
  %5 = vst [vmem:[%s1] sm:$0x3] %v4

// kernel: outconv_pallas.1
$region0: #{outconv_pallas.1}
  #allocation0 [shape = 'u32[]', space=smem, size = 0x4, offset = 0x4, fixed_abs, tag = 'smem constant byte address 0x4 - core index']
  #allocation1 [shape = 'u32[144,128]{1,0:T(1,128)}', space=vmem, size = 0x12000, scoped, tag = 'internal scratch']
  %s0 = inlined_call_operand.vmem [shape: f32[8,16], index: 0, kind: input, shape index: {}]
  %s1 = inlined_call_operand.vmem [shape: f32[3,6,8], index: 1, kind: input, shape index: {}]
  %s2 = inlined_call_operand.vmem [shape: f32[6,1], index: 2, kind: input, shape index: {}]
  %s3 = inlined_call_operand.vmem [shape: f32[6,16], index: 3, kind: output, shape index: {}]
  %s4 = sld [smem:[#allocation0]]
  $region22: #{outconv_pallas.1} parent=0
    _
  %s6 = ssub.s32 1, %s4
  %s7 = scalar_select 0, %s6, %s4
  // Predicated region
  $region2: #{outconv_pallas.1} parent=0 // pred_check
    _
  $region3: #{outconv_pallas.1} parent=0 // pred_check_branch
    %9 = sbr.rel (0) target = $region5
  $region4: #{outconv_pallas.1} parent=0 // pred_region
    _
  $region5: #{outconv_pallas.1} parent=0 // pred_fallthru
    _
  // Predicated region
  $region6: #{outconv_pallas.1} parent=0 // pred_check
    _
  $region7: #{outconv_pallas.1} parent=0 // pred_check_branch
    %11 = sbr.rel (0) target = $region9
  $region8: #{outconv_pallas.1} parent=0 // pred_region
    _
  $region9: #{outconv_pallas.1} parent=0 // pred_fallthru
    _
  // Predicated region
  $region10: #{outconv_pallas.1} parent=0 // pred_check
    _
  $region11: #{outconv_pallas.1} parent=0 // pred_check_branch
    %13 = sbr.rel (0) target = $region13
  $region12: #{outconv_pallas.1} parent=0 // pred_region
    _
  $region13: #{outconv_pallas.1} parent=0 // pred_fallthru
    _
  %v14 = vld [vmem:[%s0] sm:$0xff]
  %v15 = vlaneseq
  %v16 = vshrl.u32 %v15, 7
  %v17 = vadd.s32 %v16, 8
  %v18 = vlaneseq
  %v19 = vand.u32 %v18, 127
  %v20 = vsub.s32 %v19, 1
  %vm21 = vcmp.eq.s32.totalorder %v16, %v20
  %vm22 = vcmp.eq.s32.totalorder %v17, %v20
  %v23 = vsel %vm21, 1, 0
  %v24 = vsel %vm22, 1, 0
  %v25 = vcvt.s32.f32 %v23
  %v26 = vcvt.s32.f32 %v24
  %v27 = vadd.s32 %v19, 1
  %vm28 = vcmp.eq.s32.totalorder %v16, %v27
  %vm29 = vcmp.eq.s32.totalorder %v17, %v27
  %v30 = vsel %vm28, 1, 0
  %v31 = vsel %vm29, 1, 0
  %v32 = vcvt.s32.f32 %v30
  %v33 = vcvt.s32.f32 %v31
  %vm34 = vcmask 130048
  %v36 = vsel %vm34, %v14, 0
  %38 = vmatprep.subr.mxu0 0.0
  %39 = vmatpush1.msra.mxu0 %v25
  %40 = vmatprep.subr.mxu0 0.0
  %41 = vmatpush1.msra.mxu0 %v26
  %42 = vmatprep.subr.mxu0 0.0
  %43 = vmatpush1.msra.mxu0 0.0
  %44 = vmatprep.subr.mxu0 0.0
  %45 = vmatpush1.msra.mxu0 0.0
  %46 = vmatprep.subr.mxu0 0.0
  %47 = vmatpush1.msra.mxu0 0.0
  %48 = vmatprep.subr.mxu0 0.0
  %49 = vmatpush1.msra.mxu0 0.0
  %50 = vmatprep.subr.mxu0 0.0
  %51 = vmatpush1.msra.mxu0 0.0
  %52 = vmatprep.subr.mxu0 0.0
  %53 = vmatpush1.msra.mxu0 0.0
  %54 = vmatprep.subr.mxu0 0.0
  %55 = vmatpush1.msra.mxu0 0.0
  %56 = vmatprep.subr.mxu0 0.0
  %57 = vmatpush1.msra.mxu0 0.0
  %58 = vmatprep.subr.mxu0 0.0
  %59 = vmatpush1.msra.mxu0 0.0
  %60 = vmatprep.subr.mxu0 0.0
  %61 = vmatpush1.msra.mxu0 0.0
  %62 = vmatprep.subr.mxu0 0.0
  %63 = vmatpush1.msra.mxu0 0.0
  %64 = vmatprep.subr.mxu0 0.0
  %65 = vmatpush1.msra.mxu0 0.0
  %66 = vmatprep.subr.mxu0 0.0
  %67 = vmatpush1.msra.mxu0 0.0
  %68 = vmatprep.subr.mxu0 0.0
  %69 = vmatpush1.msra.mxu0 0.0
  %70 = vmatprep.subr.mxu0 0.0
  %71 = vmatpush1.msra.mxu0 0.0
  %72 = vmatprep.subr.mxu0 0.0
  %73 = vmatpush1.msra.mxu0 0.0
  %74 = vmatprep.subr.mxu0 0.0
  %75 = vmatpush1.msra.mxu0 0.0
  %76 = vmatprep.subr.mxu0 0.0
  %77 = vmatpush1.msra.mxu0 0.0
  %78 = vmatprep.subr.mxu0 0.0
  %79 = vmatpush1.msra.mxu0 0.0
  %80 = vmatprep.subr.mxu0 0.0
  %81 = vmatpush1.msra.mxu0 0.0
  %82 = vmatprep.subr.mxu0 0.0
  %83 = vmatpush1.msra.mxu0 0.0
  %84 = vmatprep.subr.mxu0 0.0
  %85 = vmatpush1.msra.mxu0 0.0
  %86 = vmatprep.subr.mxu0 0.0
  %87 = vmatpush1.msra.mxu0 0.0
  %88 = vmatprep.subr.mxu0 0.0
  %89 = vmatpush1.msra.mxu0 0.0
  %90 = vmatprep.subr.mxu0 0.0
  %91 = vmatpush1.msra.mxu0 0.0
  %92 = vmatprep.subr.mxu0 0.0
  %93 = vmatpush1.msra.mxu0 0.0
  %94 = vmatprep.subr.mxu0 0.0
  %95 = vmatpush1.msra.mxu0 0.0
  %96 = vmatprep.subr.mxu0 0.0
  %97 = vmatpush1.msra.mxu0 0.0
  %98 = vmatprep.subr.mxu0 0.0
  %99 = vmatpush1.msra.mxu0 0.0
  %100 = vmatprep.subr.mxu0 0.0
  %101 = vmatpush1.msra.mxu0 0.0
  %102 = vmatprep.mubr.f32.mxu0 0.0
  %103 = vmatmul.mubr.f32.gmra.mrb[0].mxu0 %v36
  %v104 = vpop.f32.mrb[0].mxu0
  %v105 = vadd.f32 0.0, %v104
  %v106 = vpop.f32.mrb[0].mxu0
  %107 = vdwg.mxu0
  %108 = vmatprep.subr.mxu0 0.0
  %109 = vmatpush1.msra.mxu0 %v32
  %110 = vmatprep.subr.mxu0 0.0
  %111 = vmatpush1.msra.mxu0 %v33
  %112 = vmatprep.subr.mxu0 0.0
  %113 = vmatpush1.msra.mxu0 0.0
  %114 = vmatprep.subr.mxu0 0.0
  %115 = vmatpush1.msra.mxu0 0.0
  %116 = vmatprep.subr.mxu0 0.0
  %117 = vmatpush1.msra.mxu0 0.0
  %118 = vmatprep.subr.mxu0 0.0
  %119 = vmatpush1.msra.mxu0 0.0
  %120 = vmatprep.subr.mxu0 0.0
  %121 = vmatpush1.msra.mxu0 0.0
  %122 = vmatprep.subr.mxu0 0.0
  %123 = vmatpush1.msra.mxu0 0.0
  %124 = vmatprep.subr.mxu0 0.0
  %125 = vmatpush1.msra.mxu0 0.0
  %126 = vmatprep.subr.mxu0 0.0
  %127 = vmatpush1.msra.mxu0 0.0
  %128 = vmatprep.subr.mxu0 0.0
  %129 = vmatpush1.msra.mxu0 0.0
  %130 = vmatprep.subr.mxu0 0.0
  %131 = vmatpush1.msra.mxu0 0.0
  %132 = vmatprep.subr.mxu0 0.0
  %133 = vmatpush1.msra.mxu0 0.0
  %134 = vmatprep.subr.mxu0 0.0
  %135 = vmatpush1.msra.mxu0 0.0
  %136 = vmatprep.subr.mxu0 0.0
  %137 = vmatpush1.msra.mxu0 0.0
  %138 = vmatprep.subr.mxu0 0.0
  %139 = vmatpush1.msra.mxu0 0.0
  %140 = vmatprep.subr.mxu0 0.0
  %141 = vmatpush1.msra.mxu0 0.0
  %142 = vmatprep.subr.mxu0 0.0
  %143 = vmatpush1.msra.mxu0 0.0
  %144 = vmatprep.subr.mxu0 0.0
  %145 = vmatpush1.msra.mxu0 0.0
  %146 = vmatprep.subr.mxu0 0.0
  %147 = vmatpush1.msra.mxu0 0.0
  %148 = vmatprep.subr.mxu0 0.0
  %149 = vmatpush1.msra.mxu0 0.0
  %150 = vmatprep.subr.mxu0 0.0
  %151 = vmatpush1.msra.mxu0 0.0
  %152 = vmatprep.subr.mxu0 0.0
  %153 = vmatpush1.msra.mxu0 0.0
  %154 = vmatprep.subr.mxu0 0.0
  %155 = vmatpush1.msra.mxu0 0.0
  %156 = vmatprep.subr.mxu0 0.0
  %157 = vmatpush1.msra.mxu0 0.0
  %158 = vmatprep.subr.mxu0 0.0
  %159 = vmatpush1.msra.mxu0 0.0
  %160 = vmatprep.subr.mxu0 0.0
  %161 = vmatpush1.msra.mxu0 0.0
  %162 = vmatprep.subr.mxu0 0.0
  %163 = vmatpush1.msra.mxu0 0.0
  %164 = vmatprep.subr.mxu0 0.0
  %165 = vmatpush1.msra.mxu0 0.0
  %166 = vmatprep.subr.mxu0 0.0
  %167 = vmatpush1.msra.mxu0 0.0
  %168 = vmatprep.subr.mxu0 0.0
  %169 = vmatpush1.msra.mxu0 0.0
  %170 = vmatprep.subr.mxu0 0.0
  %171 = vmatpush1.msra.mxu0 0.0
  %172 = vmatprep.mubr.f32.mxu0 0.0
  %173 = vmatmul.mubr.f32.gmra.mrb[0].mxu0 %v36
  %v174 = vpop.f32.mrb[0].mxu0
  %v175 = vadd.f32 0.0, %v174
  %v176 = vpop.f32.mrb[0].mxu0
  %177 = vdwg.mxu0
  %v178 = vld [vmem:[%s1] sm:$0x3f]
  %s179 = scalar_lea.vmem %s1, 8
  %v180 = vld [vmem:[%s179] sm:$0x3f]
  %vm181 = vcmask 64512
  %v183 = vsel %vm181, %v180, 0
  %185 = vmatprep.subr.mxu0 0.0
  %186 = vmatpush1.msra.mxu0 %v14
  %187 = vmatprep.subr.mxu0 0.0
  %188 = vmatpush1.msra.mxu0 0.0
  %189 = vmatprep.subr.mxu0 0.0
  %190 = vmatpush1.msra.mxu0 0.0
  %191 = vmatprep.subr.mxu0 0.0
  %192 = vmatpush1.msra.mxu0 0.0
  %193 = vmatprep.subr.mxu0 0.0
  %194 = vmatpush1.msra.mxu0 0.0
  %195 = vmatprep.subr.mxu0 0.0
  %196 = vmatpush1.msra.mxu0 0.0
  %197 = vmatprep.subr.mxu0 0.0
  %198 = vmatpush1.msra.mxu0 0.0
  %199 = vmatprep.subr.mxu0 0.0
  %200 = vmatpush1.msra.mxu0 0.0
  %201 = vmatprep.subr.mxu0 0.0
  %202 = vmatpush1.msra.mxu0 0.0
  %203 = vmatprep.subr.mxu0 0.0
  %204 = vmatpush1.msra.mxu0 0.0
  %205 = vmatprep.subr.mxu0 0.0
  %206 = vmatpush1.msra.mxu0 0.0
  %207 = vmatprep.subr.mxu0 0.0
  %208 = vmatpush1.msra.mxu0 0.0
  %209 = vmatprep.subr.mxu0 0.0
  %210 = vmatpush1.msra.mxu0 0.0
  %211 = vmatprep.subr.mxu0 0.0
  %212 = vmatpush1.msra.mxu0 0.0
  %213 = vmatprep.subr.mxu0 0.0
  %214 = vmatpush1.msra.mxu0 0.0
  %215 = vmatprep.subr.mxu0 0.0
  %216 = vmatpush1.msra.mxu0 0.0
  %217 = vmatprep.subr.mxu0 0.0
  %218 = vmatpush1.msra.mxu0 0.0
  %219 = vmatprep.subr.mxu0 0.0
  %220 = vmatpush1.msra.mxu0 0.0
  %221 = vmatprep.subr.mxu0 0.0
  %222 = vmatpush1.msra.mxu0 0.0
  %223 = vmatprep.subr.mxu0 0.0
  %224 = vmatpush1.msra.mxu0 0.0
  %225 = vmatprep.subr.mxu0 0.0
  %226 = vmatpush1.msra.mxu0 0.0
  %227 = vmatprep.subr.mxu0 0.0
  %228 = vmatpush1.msra.mxu0 0.0
  %229 = vmatprep.subr.mxu0 0.0
  %230 = vmatpush1.msra.mxu0 0.0
  %231 = vmatprep.subr.mxu0 0.0
  %232 = vmatpush1.msra.mxu0 0.0
  %233 = vmatprep.subr.mxu0 0.0
  %234 = vmatpush1.msra.mxu0 0.0
  %235 = vmatprep.subr.mxu0 0.0
  %236 = vmatpush1.msra.mxu0 0.0
  %237 = vmatprep.subr.mxu0 0.0
  %238 = vmatpush1.msra.mxu0 0.0
  %239 = vmatprep.subr.mxu0 0.0
  %240 = vmatpush1.msra.mxu0 0.0
  %241 = vmatprep.subr.mxu0 0.0
  %242 = vmatpush1.msra.mxu0 0.0
  %243 = vmatprep.subr.mxu0 0.0
  %244 = vmatpush1.msra.mxu0 0.0
  %245 = vmatprep.subr.mxu0 0.0
  %246 = vmatpush1.msra.mxu0 0.0
  %247 = vmatprep.subr.mxu0 0.0
  %248 = vmatpush1.msra.mxu0 0.0
  %249 = vmatprep.mubr.f32.mxu0 0.0
  %250 = vmatmul.mubr.f32.gmra.mrb[0].mxu0 %v183
  %v251 = vpop.f32.mrb[0].mxu0
  %v252 = vadd.f32 0.0, %v251
  %v253 = vpop.f32.mrb[0].mxu0
  %254 = vdwg.mxu0
  %v256 = vsel %vm181, %v178, 0
  %258 = vmatprep.subr.mxu0 0.0
  %259 = vmatpush1.msra.mxu0 %v105
  %260 = vmatprep.subr.mxu0 0.0
  %261 = vmatpush1.msra.mxu0 0.0
  %262 = vmatprep.subr.mxu0 0.0
  %263 = vmatpush1.msra.mxu0 0.0
  %264 = vmatprep.subr.mxu0 0.0
  %265 = vmatpush1.msra.mxu0 0.0
  %266 = vmatprep.subr.mxu0 0.0
  %267 = vmatpush1.msra.mxu0 0.0
  %268 = vmatprep.subr.mxu0 0.0
  %269 = vmatpush1.msra.mxu0 0.0
  %270 = vmatprep.subr.mxu0 0.0
  %271 = vmatpush1.msra.mxu0 0.0
  %272 = vmatprep.subr.mxu0 0.0
  %273 = vmatpush1.msra.mxu0 0.0
  %274 = vmatprep.subr.mxu0 0.0
  %275 = vmatpush1.msra.mxu0 0.0
  %276 = vmatprep.subr.mxu0 0.0
  %277 = vmatpush1.msra.mxu0 0.0
  %278 = vmatprep.subr.mxu0 0.0
  %279 = vmatpush1.msra.mxu0 0.0
  %280 = vmatprep.subr.mxu0 0.0
  %281 = vmatpush1.msra.mxu0 0.0
  %282 = vmatprep.subr.mxu0 0.0
  %283 = vmatpush1.msra.mxu0 0.0
  %284 = vmatprep.subr.mxu0 0.0
  %285 = vmatpush1.msra.mxu0 0.0
  %286 = vmatprep.subr.mxu0 0.0
  %287 = vmatpush1.msra.mxu0 0.0
  %288 = vmatprep.subr.mxu0 0.0
  %289 = vmatpush1.msra.mxu0 0.0
  %290 = vmatprep.subr.mxu0 0.0
  %291 = vmatpush1.msra.mxu0 0.0
  %292 = vmatprep.subr.mxu0 0.0
  %293 = vmatpush1.msra.mxu0 0.0
  %294 = vmatprep.subr.mxu0 0.0
  %295 = vmatpush1.msra.mxu0 0.0
  %296 = vmatprep.subr.mxu0 0.0
  %297 = vmatpush1.msra.mxu0 0.0
  %298 = vmatprep.subr.mxu0 0.0
  %299 = vmatpush1.msra.mxu0 0.0
  %300 = vmatprep.subr.mxu0 0.0
  %301 = vmatpush1.msra.mxu0 0.0
  %302 = vmatprep.subr.mxu0 0.0
  %303 = vmatpush1.msra.mxu0 0.0
  %304 = vmatprep.subr.mxu0 0.0
  %305 = vmatpush1.msra.mxu0 0.0
  %306 = vmatprep.subr.mxu0 0.0
  %307 = vmatpush1.msra.mxu0 0.0
  %308 = vmatprep.subr.mxu0 0.0
  %309 = vmatpush1.msra.mxu0 0.0
  %310 = vmatprep.subr.mxu0 0.0
  %311 = vmatpush1.msra.mxu0 0.0
  %312 = vmatprep.subr.mxu0 0.0
  %313 = vmatpush1.msra.mxu0 0.0
  %314 = vmatprep.subr.mxu0 0.0
  %315 = vmatpush1.msra.mxu0 0.0
  %316 = vmatprep.subr.mxu0 0.0
  %317 = vmatpush1.msra.mxu0 0.0
  %318 = vmatprep.subr.mxu0 0.0
  %319 = vmatpush1.msra.mxu0 0.0
  %320 = vmatprep.subr.mxu0 0.0
  %321 = vmatpush1.msra.mxu0 0.0
  %322 = vmatprep.mubr.f32.mxu0 0.0
  %323 = vmatmul.mubr.f32.gmra.mrb[0].mxu0 %v256
  %v324 = vpop.f32.mrb[0].mxu0
  %v325 = vadd.f32 %v252, %v324
  %v326 = vpop.f32.mrb[0].mxu0
  %327 = vdwg.mxu0
  %s328 = scalar_lea.vmem %s1, 16
  %v329 = vld [vmem:[%s328] sm:$0x3f]
  %v331 = vsel %vm181, %v329, 0
  %333 = vmatprep.subr.mxu0 0.0
  %334 = vmatpush1.msra.mxu0 %v175
  %335 = vmatprep.subr.mxu0 0.0
  %336 = vmatpush1.msra.mxu0 0.0
  %337 = vmatprep.subr.mxu0 0.0
  %338 = vmatpush1.msra.mxu0 0.0
  %339 = vmatprep.subr.mxu0 0.0
  %340 = vmatpush1.msra.mxu0 0.0
  %341 = vmatprep.subr.mxu0 0.0
  %342 = vmatpush1.msra.mxu0 0.0
  %343 = vmatprep.subr.mxu0 0.0
  %344 = vmatpush1.msra.mxu0 0.0
  %345 = vmatprep.subr.mxu0 0.0
  %346 = vmatpush1.msra.mxu0 0.0
  %347 = vmatprep.subr.mxu0 0.0
  %348 = vmatpush1.msra.mxu0 0.0
  %349 = vmatprep.subr.mxu0 0.0
  %350 = vmatpush1.msra.mxu0 0.0
  %351 = vmatprep.subr.mxu0 0.0
  %352 = vmatpush1.msra.mxu0 0.0
  %353 = vmatprep.subr.mxu0 0.0
  %354 = vmatpush1.msra.mxu0 0.0
  %355 = vmatprep.subr.mxu0 0.0
  %356 = vmatpush1.msra.mxu0 0.0
  %357 = vmatprep.subr.mxu0 0.0
  %358 = vmatpush1.msra.mxu0 0.0
  %359 = vmatprep.subr.mxu0 0.0
  %360 = vmatpush1.msra.mxu0 0.0
  %361 = vmatprep.subr.mxu0 0.0
  %362 = vmatpush1.msra.mxu0 0.0
  %363 = vmatprep.subr.mxu0 0.0
  %364 = vmatpush1.msra.mxu0 0.0
  %365 = vmatprep.subr.mxu0 0.0
  %366 = vmatpush1.msra.mxu0 0.0
  %367 = vmatprep.subr.mxu0 0.0
  %368 = vmatpush1.msra.mxu0 0.0
  %369 = vmatprep.subr.mxu0 0.0
  %370 = vmatpush1.msra.mxu0 0.0
  %371 = vmatprep.subr.mxu0 0.0
  %372 = vmatpush1.msra.mxu0 0.0
  %373 = vmatprep.subr.mxu0 0.0
  %374 = vmatpush1.msra.mxu0 0.0
  %375 = vmatprep.subr.mxu0 0.0
  %376 = vmatpush1.msra.mxu0 0.0
  %377 = vmatprep.subr.mxu0 0.0
  %378 = vmatpush1.msra.mxu0 0.0
  %379 = vmatprep.subr.mxu0 0.0
  %380 = vmatpush1.msra.mxu0 0.0
  %381 = vmatprep.subr.mxu0 0.0
  %382 = vmatpush1.msra.mxu0 0.0
  %383 = vmatprep.subr.mxu0 0.0
  %384 = vmatpush1.msra.mxu0 0.0
  %385 = vmatprep.subr.mxu0 0.0
  %386 = vmatpush1.msra.mxu0 0.0
  %387 = vmatprep.subr.mxu0 0.0
  %388 = vmatpush1.msra.mxu0 0.0
  %389 = vmatprep.subr.mxu0 0.0
  %390 = vmatpush1.msra.mxu0 0.0
  %391 = vmatprep.subr.mxu0 0.0
  %392 = vmatpush1.msra.mxu0 0.0
  %393 = vmatprep.subr.mxu0 0.0
  %394 = vmatpush1.msra.mxu0 0.0
  %395 = vmatprep.subr.mxu0 0.0
  %396 = vmatpush1.msra.mxu0 0.0
  %397 = vmatprep.mubr.f32.mxu0 0.0
  %398 = vmatmul.mubr.f32.gmra.mrb[0].mxu0 %v331
  %v399 = vpop.f32.mrb[0].mxu0
  %v400 = vadd.f32 0.0, %v399
  %v401 = vpop.f32.mrb[0].mxu0
  %402 = vdwg.mxu0
  %v403 = vadd.f32 %v325, %v400
  %v404 = vld [vmem:[%s2] sm:$0x3f]
  %406 = vset.pattern.permute.xlu0 0
  %407 = vperm.xlu0 %406, %v404
  %v408 = vpop.permute.xlu0 %407
  %v410 = vadd.f32 %v403, %v408
  %v411 = vxor.u32 %v410, 2147483648
  %v412 = vmul.f32 %v411, 1.442695
  %v413 = vpow.pop %v412
  %v414 = vadd.f32 %v413, 1.0
  %v415 = vrcp.pop %v414
  %v416 = vmul.f32 1.0, %v415
  %vm417 = vcmask 128000
  %418 = vst.msk [vmem:[%s3] sm:$0x3f] %vm417, %v416
  // Predicated region
  $region14: #{outconv_pallas.1} parent=0 // pred_check
    _
  $region15: #{outconv_pallas.1} parent=0 // pred_check_branch
    %420 = sbr.rel (0) target = $region17
  $region16: #{outconv_pallas.1} parent=0 // pred_region
    _
  $region17: #{outconv_pallas.1} parent=0 // pred_fallthru
    _
  // Predicated region
  $region18: #{outconv_pallas.1} parent=0 // pred_check
    _
  $region19: #{outconv_pallas.1} parent=0 // pred_check_branch
    %422 = sbr.rel (0) target = $region21
  $region20: #{outconv_pallas.1} parent=0 // pred_region
    _
  $region21: #{outconv_pallas.1} parent=0 // pred_fallthru
    _

</llo_original>
